<compile_context>
chip_gen: v6e
topology: v6e:2x2x1
jax: 0.10.0
libtpu: 0.0.40
codegen_flags: <defaults>
</compile_context>

<pallas_src>
import functools

import jax
import jax.numpy as jnp
from jax.experimental import pallas as pl
from jax.experimental.pallas import tpu as pltpu


# -----------------------------------------------------------------------------
# Host-side helper: static boundary masks for the "same" depthwise conv.
# mask[t, hw] = 1.0 if tap t (kh,kw) reads an in-bounds input pixel at output
# position hw, else 0.0.  Shape (K*K, H*W); tiny and constant under jit.
# -----------------------------------------------------------------------------
def _boundary_masks(H, W, K, pad, dtype=jnp.float32):
    r = jnp.arange(H * W, dtype=jnp.int32)
    hh = r // W
    ww = r % W
    rows = []
    for kh in range(K):
        dh = kh - pad
        for kw in range(K):
            dw = kw - pad
            ok = (hh >= -dh) & (hh < H - dh) & (ww >= -dw) & (ww < W - dw)
            rows.append(ok)
    return jnp.stack(rows, axis=0).astype(dtype)


# -----------------------------------------------------------------------------
# Fused kernel.
#   x_ref   : (N*Cin, H*W)   input (native dtype), spatial on lanes
#   mask_ref: (K*K,  H*W) f32 boundary masks (precomputed, static)
#   wdw_ref : (N*Cin, K*K) f32 depthwise taps (tiled over N)
#   wpw_ref : (Cout, Cin)  f32 pointwise weight
#   gb_ref  : (Cin, 2)     f32 [:,0]=gamma, [:,1]=beta
#   o_ref   : (N*Cout, H*W) f32 output (reshapes to NCHW for free)
# -----------------------------------------------------------------------------
def _sepconv_fused_kernel(x_ref, mask_ref, wdw_ref, wpw_ref, gb_ref, o_ref,
                          *, N, Cin, Cout, H, W, K, pad, eps):
    HW = H * W
    x = x_ref[...].astype(jnp.float32)      # (N*Cin, HW)
    mask = mask_ref[...]                    # (K*K, HW)
    wdw = wdw_ref[...]                      # (N*Cin, K*K)

    # ---- depthwise "same" conv: taps are lane rolls (XLU) + masked MACs ----
    acc = jnp.zeros((N * Cin, HW), jnp.float32)
    for kh in range(K):
        dh = kh - pad
        for kw in range(K):
            dw = kw - pad
            t = kh * K + kw
            off = dh * W + dw
            # tap[hw] = x[hw + off] (wrap-around lanes are masked off below)
            tap = x if off == 0 else pltpu.roll(x, shift=(-off) % HW, axis=1)
            coef = wdw[:, t:t + 1] * mask[t:t + 1, :]        # (N*Cin, HW)
            acc = acc + tap * coef

    # ---- BatchNorm batch statistics (biased var, PyTorch training mode) ----
    # TODO(synk): E[x^2]-E[x]^2 in f32 can cancel badly for very large
    # N*H*W; a band-tiled version should combine per-band (count,mean,M2).
    inv_count = 1.0 / float(N * HW)
    s1 = jnp.sum(acc, axis=1, keepdims=True)                 # (N*Cin, 1)
    s2 = jnp.sum(acc * acc, axis=1, keepdims=True)           # (N*Cin, 1)
    csum = s1[0:Cin, :]
    csq = s2[0:Cin, :]
    for n in range(1, N):                                    # combine over batch
        csum = csum + s1[n * Cin:(n + 1) * Cin, :]
        csq = csq + s2[n * Cin:(n + 1) * Cin, :]
    mean = csum * inv_count                                  # (Cin, 1)
    var = jnp.maximum(csq * inv_count - mean * mean, 0.0)
    invstd = jax.lax.rsqrt(var + eps)

    gamma = gb_ref[:, 0:1]                                   # (Cin, 1)
    beta = gb_ref[:, 1:2]                                    # (Cin, 1)
    scale = gamma * invstd                                   # (Cin, 1)
    shift = beta - mean * scale                              # (Cin, 1)

    # Apply BN to the VMEM-resident depthwise result (per-row scale/shift).
    scale_rows = jnp.concatenate([scale] * N, axis=0)        # (N*Cin, 1)
    shift_rows = jnp.concatenate([shift] * N, axis=0)
    y = acc * scale_rows + shift_rows                        # (N*Cin, HW)

    # ---- pointwise 1x1 conv: (Cout,Cin)@(Cin,HW) per batch item on the MXU --
    w = wpw_ref[...].astype(jnp.bfloat16)                    # (Cout, Cin)
    for n in range(N):
        yn = y[n * Cin:(n + 1) * Cin, :].astype(jnp.bfloat16)
        zn = jnp.dot(w, yn, preferred_element_type=jnp.float32)
        o_ref[n * Cout:(n + 1) * Cout, :] = zn.astype(o_ref.dtype)


# -----------------------------------------------------------------------------
# Wrapper
# -----------------------------------------------------------------------------
def separable_conv2d(x_nchw, dw_weight, pw_weight, gamma, beta,
                     *, stride=1, padding=0, dilation=1, eps=1e-5):
    """Forward of SeparableConv2d (training-mode BatchNorm, bias=False convs).

    x_nchw    : (N, Cin, H, W)
    dw_weight : (Cin, 1, K, K)    depthwise conv weight (PyTorch layout)
    pw_weight : (Cout, Cin, 1, 1) pointwise conv weight (PyTorch layout)
    gamma/beta: (Cin,)            BatchNorm affine parameters
    """
    assert stride == 1 and dilation == 1
    N, Cin, H, W = x_nchw.shape
    K = dw_weight.shape[-1]
    Cout = pw_weight.shape[0]
    assert K == 2 * padding + 1
    HW = H * W

    # NCHW -> (N*Cin, H*W): contiguous reshape only (no transpose / astype pass).
    x2 = x_nchw.reshape(N * Cin, HW)
    wdw_t = jnp.tile(dw_weight[:, 0].reshape(Cin, K * K).astype(jnp.float32),
                     (N, 1))                                  # (N*Cin, K*K)
    mask = _boundary_masks(H, W, K, padding)                  # (K*K, HW)
    wpw = pw_weight[:, :, 0, 0].astype(jnp.float32)           # (Cout, Cin)
    gb = jnp.stack([gamma, beta], axis=1).astype(jnp.float32) # (Cin, 2)

    kern = functools.partial(_sepconv_fused_kernel, N=N, Cin=Cin, Cout=Cout,
                             H=H, W=W, K=K, pad=padding, eps=float(eps))

    z2 = pl.pallas_call(
        kern,
        grid=(1,),
        in_specs=[
            pl.BlockSpec((N * Cin, HW), lambda i: (0, 0)),
            pl.BlockSpec((K * K, HW), lambda i: (0, 0)),
            pl.BlockSpec((N * Cin, K * K), lambda i: (0, 0)),
            pl.BlockSpec((Cout, Cin), lambda i: (0, 0)),
            pl.BlockSpec((Cin, 2), lambda i: (0, 0)),
        ],
        out_specs=pl.BlockSpec((N * Cout, HW), lambda i: (0, 0)),
        out_shape=jax.ShapeDtypeStruct((N * Cout, HW), jnp.float32),
        compiler_params=pltpu.CompilerParams(
            dimension_semantics=("arbitrary",),
            vmem_limit_bytes=32 * 1024 * 1024),
    )(x2, mask, wdw_t, wpw, gb)

    # (N*Cout, H*W) is already NCHW ordering: reshape only, no transpose.
    return z2.reshape(N, Cout, H, W)


# -----------------------------------------------------------------------------
# Pure-JAX reference (NCHW) to verify the kernel.
# -----------------------------------------------------------------------------
def separable_conv2d_ref(x, dw_w, pw_w, gamma, beta, *, padding, eps=1e-5):
    N, C, H, W = x.shape
    K = dw_w.shape[-1]
    Ho = H + 2 * padding - K + 1
    Wo = W + 2 * padding - K + 1
    xp = jnp.pad(x, ((0, 0), (0, 0), (padding, padding), (padding, padding)))
    chans = []
    for c in range(C):
        acc = jnp.zeros((N, Ho, Wo), jnp.float32)
        for kh in range(K):
            for kw in range(K):
                acc = acc + xp[:, c, kh:kh + Ho, kw:kw + Wo] * dw_w[c, 0, kh, kw]
        chans.append(acc)
    y = jnp.stack(chans, axis=1)                              # (N,C,Ho,Wo)
    mean = y.mean(axis=(0, 2, 3))
    var = y.var(axis=(0, 2, 3))                               # biased, like PyTorch
    yn = (y - mean[None, :, None, None]) / jnp.sqrt(var[None, :, None, None] + eps)
    yn = yn * gamma[None, :, None, None] + beta[None, :, None, None]
    z = jnp.einsum('nchw,oc->nohw', yn, pw_w[:, :, 0, 0])
    return z


if __name__ == "__main__":
    # SeparableConv2d(in_channels=4, out_channels=8, kernel_size=3,
    #                 stride=1, padding=1, dilation=1, bias=False)
    N, Cin, H, W = 2, 4, 16, 16
    Cout, K, PAD = 8, 3, 1

    key = jax.random.PRNGKey(0)
    kx, kdw, kpw, kg, kb = jax.random.split(key, 5)
    x = jax.random.normal(kx, (N, Cin, H, W), jnp.float32)
    dw_w = jax.random.normal(kdw, (Cin, 1, K, K), jnp.float32) * 0.2     # conv1.weight
    pw_w = jax.random.normal(kpw, (Cout, Cin, 1, 1), jnp.float32) * 0.2  # pointwise.weight
    gamma = 1.0 + 0.1 * jax.random.normal(kg, (Cin,), jnp.float32)       # bn.weight
    beta = 0.1 * jax.random.normal(kb, (Cin,), jnp.float32)              # bn.bias

    fwd = jax.jit(functools.partial(separable_conv2d,
                                    stride=1, padding=PAD, dilation=1))
    out = jax.block_until_ready(fwd(x, dw_w, pw_w, gamma, beta))

    ref = separable_conv2d_ref(x, dw_w, pw_w, gamma, beta, padding=PAD)
    assert out.shape == (N, Cout, H, W), out.shape
    assert jnp.allclose(out, ref, rtol=2e-2, atol=2e-2), \
        float(jnp.max(jnp.abs(out - ref)))

    print("KERNEL_OK")
</pallas_src>

<mosaic_0001>
module attributes {stable_mosaic.version = 11 : i64} {
  func.func @_sepconv_fused_kernel(%arg0: i32, %arg1: memref<8x256xf32, #tpu.memory_space<vmem>>, %arg2: memref<9x256xf32, #tpu.memory_space<vmem>>, %arg3: memref<8x9xf32, #tpu.memory_space<vmem>>, %arg4: memref<8x4xf32, #tpu.memory_space<vmem>>, %arg5: memref<4x2xf32, #tpu.memory_space<vmem>>, %arg6: memref<16x256xf32, #tpu.memory_space<vmem>>) attributes {dimension_semantics = [#tpu.dimension_semantics<arbitrary>], iteration_bounds = array<i64: 1>, scalar_prefetch = 0 : i64, scratch_operands = 0 : i64, tpu.core_type = #tpu.core_type<tc>, window_params = [{pipeline_mode = #tpu.pipeline_mode<synchronous>, transform_indices = @transform_0, window_bounds = array<i64: 8, 256>}, {pipeline_mode = #tpu.pipeline_mode<synchronous>, transform_indices = @transform_1, window_bounds = array<i64: 9, 256>}, {pipeline_mode = #tpu.pipeline_mode<synchronous>, transform_indices = @transform_2, window_bounds = array<i64: 8, 9>}, {pipeline_mode = #tpu.pipeline_mode<synchronous>, transform_indices = @transform_3, window_bounds = array<i64: 8, 4>}, {pipeline_mode = #tpu.pipeline_mode<synchronous>, transform_indices = @transform_4, window_bounds = array<i64: 4, 2>}, {pipeline_mode = #tpu.pipeline_mode<synchronous>, transform_indices = @transform_5, window_bounds = array<i64: 16, 256>}]} {
    %c0 = arith.constant 0 : index
    %c0_0 = arith.constant 0 : index
    %0 = vector.load %arg1[%c0, %c0_0] : memref<8x256xf32, #tpu.memory_space<vmem>>, vector<8x256xf32>
    %c0_1 = arith.constant 0 : index
    %c0_2 = arith.constant 0 : index
    %1 = vector.load %arg2[%c0_1, %c0_2] : memref<9x256xf32, #tpu.memory_space<vmem>>, vector<9x256xf32>
    %c0_3 = arith.constant 0 : index
    %c0_4 = arith.constant 0 : index
    %2 = vector.load %arg3[%c0_3, %c0_4] : memref<8x9xf32, #tpu.memory_space<vmem>>, vector<8x9xf32>
    %cst = arith.constant 0.000000e+00 : f32
    %3 = vector.broadcast %cst : f32 to vector<8x256xf32>
    %c17_i32 = arith.constant 17 : i32
    %4 = tpu.dynamic_rotate %0 by %c17_i32 dim 1 : vector<8x256xf32>, i32 -> vector<8x256xf32>
    %5 = vector.extract_strided_slice %2 {offsets = [0, 0], sizes = [8, 1], strides = [1, 1]} : vector<8x9xf32> to vector<8x1xf32>
    %6 = vector.extract_strided_slice %1 {offsets = [0, 0], sizes = [1, 256], strides = [1, 1]} : vector<9x256xf32> to vector<1x256xf32>
    %7 = vector.broadcast %5 : vector<8x1xf32> to vector<8x256xf32>
    %8 = vector.broadcast %6 : vector<1x256xf32> to vector<8x256xf32>
    %9 = arith.mulf %7, %8 : vector<8x256xf32>
    %10 = arith.mulf %4, %9 : vector<8x256xf32>
    %11 = arith.addf %3, %10 : vector<8x256xf32>
    %c16_i32 = arith.constant 16 : i32
    %12 = tpu.dynamic_rotate %0 by %c16_i32 dim 1 : vector<8x256xf32>, i32 -> vector<8x256xf32>
    %13 = vector.extract_strided_slice %2 {offsets = [0, 1], sizes = [8, 1], strides = [1, 1]} : vector<8x9xf32> to vector<8x1xf32>
    %14 = vector.extract_strided_slice %1 {offsets = [1, 0], sizes = [1, 256], strides = [1, 1]} : vector<9x256xf32> to vector<1x256xf32>
    %15 = vector.broadcast %13 : vector<8x1xf32> to vector<8x256xf32>
    %16 = vector.broadcast %14 : vector<1x256xf32> to vector<8x256xf32>
    %17 = arith.mulf %15, %16 : vector<8x256xf32>
    %18 = arith.mulf %12, %17 : vector<8x256xf32>
    %19 = arith.addf %11, %18 : vector<8x256xf32>
    %c15_i32 = arith.constant 15 : i32
    %20 = tpu.dynamic_rotate %0 by %c15_i32 dim 1 : vector<8x256xf32>, i32 -> vector<8x256xf32>
    %21 = vector.extract_strided_slice %2 {offsets = [0, 2], sizes = [8, 1], strides = [1, 1]} : vector<8x9xf32> to vector<8x1xf32>
    %22 = vector.extract_strided_slice %1 {offsets = [2, 0], sizes = [1, 256], strides = [1, 1]} : vector<9x256xf32> to vector<1x256xf32>
    %23 = vector.broadcast %21 : vector<8x1xf32> to vector<8x256xf32>
    %24 = vector.broadcast %22 : vector<1x256xf32> to vector<8x256xf32>
    %25 = arith.mulf %23, %24 : vector<8x256xf32>
    %26 = arith.mulf %20, %25 : vector<8x256xf32>
    %27 = arith.addf %19, %26 : vector<8x256xf32>
    %c1_i32 = arith.constant 1 : i32
    %28 = tpu.dynamic_rotate %0 by %c1_i32 dim 1 : vector<8x256xf32>, i32 -> vector<8x256xf32>
    %29 = vector.extract_strided_slice %2 {offsets = [0, 3], sizes = [8, 1], strides = [1, 1]} : vector<8x9xf32> to vector<8x1xf32>
    %30 = vector.extract_strided_slice %1 {offsets = [3, 0], sizes = [1, 256], strides = [1, 1]} : vector<9x256xf32> to vector<1x256xf32>
    %31 = vector.broadcast %29 : vector<8x1xf32> to vector<8x256xf32>
    %32 = vector.broadcast %30 : vector<1x256xf32> to vector<8x256xf32>
    %33 = arith.mulf %31, %32 : vector<8x256xf32>
    %34 = arith.mulf %28, %33 : vector<8x256xf32>
    %35 = arith.addf %27, %34 : vector<8x256xf32>
    %36 = vector.extract_strided_slice %2 {offsets = [0, 4], sizes = [8, 1], strides = [1, 1]} : vector<8x9xf32> to vector<8x1xf32>
    %37 = vector.extract_strided_slice %1 {offsets = [4, 0], sizes = [1, 256], strides = [1, 1]} : vector<9x256xf32> to vector<1x256xf32>
    %38 = vector.broadcast %36 : vector<8x1xf32> to vector<8x256xf32>
    %39 = vector.broadcast %37 : vector<1x256xf32> to vector<8x256xf32>
    %40 = arith.mulf %38, %39 : vector<8x256xf32>
    %41 = arith.mulf %0, %40 : vector<8x256xf32>
    %42 = arith.addf %35, %41 : vector<8x256xf32>
    %c255_i32 = arith.constant 255 : i32
    %43 = tpu.dynamic_rotate %0 by %c255_i32 dim 1 : vector<8x256xf32>, i32 -> vector<8x256xf32>
    %44 = vector.extract_strided_slice %2 {offsets = [0, 5], sizes = [8, 1], strides = [1, 1]} : vector<8x9xf32> to vector<8x1xf32>
    %45 = vector.extract_strided_slice %1 {offsets = [5, 0], sizes = [1, 256], strides = [1, 1]} : vector<9x256xf32> to vector<1x256xf32>
    %46 = vector.broadcast %44 : vector<8x1xf32> to vector<8x256xf32>
    %47 = vector.broadcast %45 : vector<1x256xf32> to vector<8x256xf32>
    %48 = arith.mulf %46, %47 : vector<8x256xf32>
    %49 = arith.mulf %43, %48 : vector<8x256xf32>
    %50 = arith.addf %42, %49 : vector<8x256xf32>
    %c241_i32 = arith.constant 241 : i32
    %51 = tpu.dynamic_rotate %0 by %c241_i32 dim 1 : vector<8x256xf32>, i32 -> vector<8x256xf32>
    %52 = vector.extract_strided_slice %2 {offsets = [0, 6], sizes = [8, 1], strides = [1, 1]} : vector<8x9xf32> to vector<8x1xf32>
    %53 = vector.extract_strided_slice %1 {offsets = [6, 0], sizes = [1, 256], strides = [1, 1]} : vector<9x256xf32> to vector<1x256xf32>
    %54 = vector.broadcast %52 : vector<8x1xf32> to vector<8x256xf32>
    %55 = vector.broadcast %53 : vector<1x256xf32> to vector<8x256xf32>
    %56 = arith.mulf %54, %55 : vector<8x256xf32>
    %57 = arith.mulf %51, %56 : vector<8x256xf32>
    %58 = arith.addf %50, %57 : vector<8x256xf32>
    %c240_i32 = arith.constant 240 : i32
    %59 = tpu.dynamic_rotate %0 by %c240_i32 dim 1 : vector<8x256xf32>, i32 -> vector<8x256xf32>
    %60 = vector.extract_strided_slice %2 {offsets = [0, 7], sizes = [8, 1], strides = [1, 1]} : vector<8x9xf32> to vector<8x1xf32>
    %61 = vector.extract_strided_slice %1 {offsets = [7, 0], sizes = [1, 256], strides = [1, 1]} : vector<9x256xf32> to vector<1x256xf32>
    %62 = vector.broadcast %60 : vector<8x1xf32> to vector<8x256xf32>
    %63 = vector.broadcast %61 : vector<1x256xf32> to vector<8x256xf32>
    %64 = arith.mulf %62, %63 : vector<8x256xf32>
    %65 = arith.mulf %59, %64 : vector<8x256xf32>
    %66 = arith.addf %58, %65 : vector<8x256xf32>
    %c239_i32 = arith.constant 239 : i32
    %67 = tpu.dynamic_rotate %0 by %c239_i32 dim 1 : vector<8x256xf32>, i32 -> vector<8x256xf32>
    %68 = vector.extract_strided_slice %2 {offsets = [0, 8], sizes = [8, 1], strides = [1, 1]} : vector<8x9xf32> to vector<8x1xf32>
    %69 = vector.extract_strided_slice %1 {offsets = [8, 0], sizes = [1, 256], strides = [1, 1]} : vector<9x256xf32> to vector<1x256xf32>
    %70 = vector.broadcast %68 : vector<8x1xf32> to vector<8x256xf32>
    %71 = vector.broadcast %69 : vector<1x256xf32> to vector<8x256xf32>
    %72 = arith.mulf %70, %71 : vector<8x256xf32>
    %73 = arith.mulf %67, %72 : vector<8x256xf32>
    %74 = arith.addf %66, %73 : vector<8x256xf32>
    %cst_5 = arith.constant dense<0.000000e+00> : vector<8xf32>
    %75 = vector.multi_reduction <add>, %74, %cst_5 [1] : vector<8x256xf32> to vector<8xf32>
    %76 = vector.shape_cast %75 : vector<8xf32> to vector<8x1xf32>
    %77 = arith.mulf %74, %74 : vector<8x256xf32>
    %cst_6 = arith.constant dense<0.000000e+00> : vector<8xf32>
    %78 = vector.multi_reduction <add>, %77, %cst_6 [1] : vector<8x256xf32> to vector<8xf32>
    %79 = vector.shape_cast %78 : vector<8xf32> to vector<8x1xf32>
    %80 = vector.extract_strided_slice %76 {offsets = [0, 0], sizes = [4, 1], strides = [1, 1]} : vector<8x1xf32> to vector<4x1xf32>
    %81 = vector.extract_strided_slice %79 {offsets = [0, 0], sizes = [4, 1], strides = [1, 1]} : vector<8x1xf32> to vector<4x1xf32>
    %82 = vector.extract_strided_slice %76 {offsets = [4, 0], sizes = [4, 1], strides = [1, 1]} : vector<8x1xf32> to vector<4x1xf32>
    %83 = arith.addf %80, %82 : vector<4x1xf32>
    %84 = vector.extract_strided_slice %79 {offsets = [4, 0], sizes = [4, 1], strides = [1, 1]} : vector<8x1xf32> to vector<4x1xf32>
    %85 = arith.addf %81, %84 : vector<4x1xf32>
    %cst_7 = arith.constant 0.001953125 : f32
    %86 = vector.broadcast %cst_7 : f32 to vector<4x1xf32>
    %87 = arith.mulf %83, %86 : vector<4x1xf32>
    %cst_8 = arith.constant 0.001953125 : f32
    %88 = vector.broadcast %cst_8 : f32 to vector<4x1xf32>
    %89 = arith.mulf %85, %88 : vector<4x1xf32>
    %90 = arith.mulf %87, %87 : vector<4x1xf32>
    %91 = arith.subf %89, %90 : vector<4x1xf32>
    %cst_9 = arith.constant 0.000000e+00 : f32
    %92 = vector.broadcast %cst_9 : f32 to vector<4x1xf32>
    %93 = arith.maximumf %91, %92 : vector<4x1xf32>
    %cst_10 = arith.constant 9.99999974E-6 : f32
    %94 = vector.broadcast %cst_10 : f32 to vector<4x1xf32>
    %95 = arith.addf %93, %94 : vector<4x1xf32>
    %96 = math.rsqrt %95 : vector<4x1xf32>
    %c0_11 = arith.constant 0 : index
    %c0_12 = arith.constant 0 : index
    %97 = vector.load %arg5[%c0_11, %c0_12] : memref<4x2xf32, #tpu.memory_space<vmem>>, vector<4x1xf32>
    %c0_13 = arith.constant 0 : index
    %c1 = arith.constant 1 : index
    %98 = vector.load %arg5[%c0_13, %c1] : memref<4x2xf32, #tpu.memory_space<vmem>>, vector<4x1xf32>
    %99 = arith.mulf %97, %96 : vector<4x1xf32>
    %100 = arith.mulf %87, %99 : vector<4x1xf32>
    %101 = arith.subf %98, %100 : vector<4x1xf32>
    %102 = tpu.concatenate %99, %99 in 0 : vector<4x1xf32>, vector<4x1xf32> -> vector<8x1xf32>
    %103 = tpu.concatenate %101, %101 in 0 : vector<4x1xf32>, vector<4x1xf32> -> vector<8x1xf32>
    %104 = vector.broadcast %102 : vector<8x1xf32> to vector<8x256xf32>
    %105 = arith.mulf %74, %104 : vector<8x256xf32>
    %106 = vector.broadcast %103 : vector<8x1xf32> to vector<8x256xf32>
    %107 = arith.addf %105, %106 : vector<8x256xf32>
    %c0_14 = arith.constant 0 : index
    %c0_15 = arith.constant 0 : index
    %108 = vector.load %arg4[%c0_14, %c0_15] : memref<8x4xf32, #tpu.memory_space<vmem>>, vector<8x4xf32>
    %109 = arith.truncf %108 : vector<8x4xf32> to vector<8x4xbf16>
    %110 = vector.extract_strided_slice %107 {offsets = [0, 0], sizes = [4, 256], strides = [1, 1]} : vector<8x256xf32> to vector<4x256xf32>
    %111 = arith.truncf %110 : vector<4x256xf32> to vector<4x256xbf16>
    %cst_16 = arith.constant dense<0.000000e+00> : vector<8x256xf32>
    %112 = tpu.matmul %109, %111, %cst_16 {dimension_numbers = #tpu.dot_dimension_numbers<[1], [0], [0], [1], [0, 0, 1, 1], [], []>} : vector<8x4xbf16>, vector<4x256xbf16>, vector<8x256xf32> -> vector<8x256xf32>
    %c0_17 = arith.constant 0 : index
    %c0_18 = arith.constant 0 : index
    %113 = vector.load %arg6[%c0_17, %c0_18] : memref<16x256xf32, #tpu.memory_space<vmem>>, vector<8x256xf32>
    tpu.vector_store %arg6[%c0_17, %c0_18], %112 {strides = array<i32>} : memref<16x256xf32, #tpu.memory_space<vmem>>, vector<8x256xf32>,
    %114 = vector.extract_strided_slice %107 {offsets = [4, 0], sizes = [4, 256], strides = [1, 1]} : vector<8x256xf32> to vector<4x256xf32>
    %115 = arith.truncf %114 : vector<4x256xf32> to vector<4x256xbf16>
    %cst_19 = arith.constant dense<0.000000e+00> : vector<8x256xf32>
    %116 = tpu.matmul %109, %115, %cst_19 {dimension_numbers = #tpu.dot_dimension_numbers<[1], [0], [0], [1], [0, 0, 1, 1], [], []>} : vector<8x4xbf16>, vector<4x256xbf16>, vector<8x256xf32> -> vector<8x256xf32>
    %c8 = arith.constant 8 : index
    %c0_20 = arith.constant 0 : index
    %117 = vector.load %arg6[%c8, %c0_20] : memref<16x256xf32, #tpu.memory_space<vmem>>, vector<8x256xf32>
    tpu.vector_store %arg6[%c8, %c0_20], %116 {strides = array<i32>} : memref<16x256xf32, #tpu.memory_space<vmem>>, vector<8x256xf32>,
    return
  }
  func.func @transform_0(%arg0: i32) -> (i32, i32) {
    %c0_i32 = arith.constant 0 : i32
    %c0_i32_0 = arith.constant 0 : i32
    %c0_i32_1 = arith.constant 0 : i32
    return %c0_i32, %c0_i32_0 : i32, i32
  }
  func.func @transform_1(%arg0: i32) -> (i32, i32) {
    %c0_i32 = arith.constant 0 : i32
    %c0_i32_0 = arith.constant 0 : i32
    %c0_i32_1 = arith.constant 0 : i32
    return %c0_i32, %c0_i32_0 : i32, i32
  }
  func.func @transform_2(%arg0: i32) -> (i32, i32) {
    %c0_i32 = arith.constant 0 : i32
    %c0_i32_0 = arith.constant 0 : i32
    %c0_i32_1 = arith.constant 0 : i32
    return %c0_i32, %c0_i32_0 : i32, i32
  }
  func.func @transform_3(%arg0: i32) -> (i32, i32) {
    %c0_i32 = arith.constant 0 : i32
    %c0_i32_0 = arith.constant 0 : i32
    %c0_i32_1 = arith.constant 0 : i32
    return %c0_i32, %c0_i32_0 : i32, i32
  }
  func.func @transform_4(%arg0: i32) -> (i32, i32) {
    %c0_i32 = arith.constant 0 : i32
    %c0_i32_0 = arith.constant 0 : i32
    %c0_i32_1 = arith.constant 0 : i32
    return %c0_i32, %c0_i32_0 : i32, i32
  }
  func.func @transform_5(%arg0: i32) -> (i32, i32) {
    %c0_i32 = arith.constant 0 : i32
    %c0_i32_0 = arith.constant 0 : i32
    %c0_i32_1 = arith.constant 0 : i32
    return %c0_i32, %c0_i32_0 : i32, i32
  }
}

</mosaic_0001>

<llo_original>
// kernel: separable_conv2d.1
$region0: #{separable_conv2d.1}
  #allocation0 [shape = 'u32[]', space=smem, size = 0x4, offset = 0x4, fixed_abs, tag = 'smem constant byte address 0x4 - core index']
  #allocation1 [shape = 'u32[144,128]{1,0:T(1,128)}', space=vmem, size = 0x12000, scoped, tag = 'internal scratch']
  %s0 = inlined_call_operand.vmem [shape: f32[8,256], index: 0, kind: input, shape index: {}]
  %s1 = inlined_call_operand.vmem [shape: f32[9,256], index: 1, kind: input, shape index: {}]
  %s2 = inlined_call_operand.vmem [shape: f32[8,9], index: 2, kind: input, shape index: {}]
  %s3 = inlined_call_operand.vmem [shape: f32[8,4], index: 3, kind: input, shape index: {}]
  %s4 = inlined_call_operand.vmem [shape: f32[4,2], index: 4, kind: input, shape index: {}]
  %s5 = inlined_call_operand.vmem [shape: f32[16,256], index: 5, kind: output, shape index: {}]
  %s6 = sld [smem:[#allocation0]]
  $region30: #{separable_conv2d.1} parent=0
    _
  %s8 = ssub.s32 1, %s6
  %s9 = scalar_select 0, %s8, %s6
  // Predicated region
  $region2: #{separable_conv2d.1} parent=0 // pred_check
    _
  $region3: #{separable_conv2d.1} parent=0 // pred_check_branch
    %11 = sbr.rel (0) target = $region5
  $region4: #{separable_conv2d.1} parent=0 // pred_region
    _
  $region5: #{separable_conv2d.1} parent=0 // pred_fallthru
    _
  // Predicated region
  $region6: #{separable_conv2d.1} parent=0 // pred_check
    _
  $region7: #{separable_conv2d.1} parent=0 // pred_check_branch
    %13 = sbr.rel (0) target = $region9
  $region8: #{separable_conv2d.1} parent=0 // pred_region
    _
  $region9: #{separable_conv2d.1} parent=0 // pred_fallthru
    _
  // Predicated region
  $region10: #{separable_conv2d.1} parent=0 // pred_check
    _
  $region11: #{separable_conv2d.1} parent=0 // pred_check_branch
    %15 = sbr.rel (0) target = $region13
  $region12: #{separable_conv2d.1} parent=0 // pred_region
    _
  $region13: #{separable_conv2d.1} parent=0 // pred_fallthru
    _
  // Predicated region
  $region14: #{separable_conv2d.1} parent=0 // pred_check
    _
  $region15: #{separable_conv2d.1} parent=0 // pred_check_branch
    %17 = sbr.rel (0) target = $region17
  $region16: #{separable_conv2d.1} parent=0 // pred_region
    _
  $region17: #{separable_conv2d.1} parent=0 // pred_fallthru
    _
  // Predicated region
  $region18: #{separable_conv2d.1} parent=0 // pred_check
    _
  $region19: #{separable_conv2d.1} parent=0 // pred_check_branch
    %19 = sbr.rel (0) target = $region21
  $region20: #{separable_conv2d.1} parent=0 // pred_region
    _
  $region21: #{separable_conv2d.1} parent=0 // pred_fallthru
    _
  %v21 = vld [vmem:[%s0] sm:$0xff]
  %v22 = vld [vmem:[%s0 + $0x8] sm:$0xff]
  %v23 = vld [vmem:[%s1] sm:$0xff]
  %v24 = vld [vmem:[%s1 + $0x8] sm:$0xff]
  %v25 = vld [vmem:[%s1 + $0x10] sm:$0x1]
  %v26 = vld [vmem:[%s1 + $0x18] sm:$0x1]
  %v27 = vld [vmem:[%s2] sm:$0xff]
  %28 = vrot.lane.b32.xlu0 %v21, 17
  %v29 = vpop.permute.xlu0 %28
  %30 = vrot.lane.b32.xlu0 %v22, 17
  %v31 = vpop.permute.xlu0 %30
  %v32 = vlaneseq
  %v33 = vand.u32 %v32, 127
  %vm34 = vcmp.lt.s32.totalorder %v33, 17
  %v35 = vsel %vm34, %v29, %v31
  %v36 = vsel %vm34, %v31, %v29
  %38 = vset.pattern.permute.xlu0 0
  %39 = vperm.xlu0 %38, %v27
  %v40 = vpop.permute.xlu0 %39
  %v42 = vlaneseq
  %v43 = vshrl.u32 %v42, 7
  %v44 = vsub.s32 0, %v43
  %v45 = vrot.slane %v23, %v44
  %v46 = vlaneseq
  %v47 = vshrl.u32 %v46, 7
  %v48 = vsub.s32 0, %v47
  %v49 = vrot.slane %v24, %v48
  %v50 = vmul.f32 %v40, %v45
  %v51 = vmul.f32 %v40, %v49
  %v52 = vmul.f32 %v36, %v50
  %v53 = vmul.f32 %v35, %v51
  %v54 = vadd.f32 %v52, 0.0
  %v55 = vadd.f32 %v53, 0.0
  %56 = vrot.lane.b32.xlu0 %v21, 16
  %v57 = vpop.permute.xlu0 %56
  %58 = vrot.lane.b32.xlu0 %v22, 16
  %v59 = vpop.permute.xlu0 %58
  %vm60 = vcmp.lt.s32.totalorder %v33, 16
  %v61 = vsel %vm60, %v57, %v59
  %v62 = vsel %vm60, %v59, %v57
  %63 = vset.pattern.permute.xlu0 1
  %64 = vperm.xlu0 %63, %v27
  %v65 = vpop.permute.xlu0 %64
  %v67 = vlaneseq
  %v68 = vshrl.u32 %v67, 7
  %v69 = vsub.s32 1, %v68
  %v70 = vrot.slane %v23, %v69
  %v71 = vlaneseq
  %v72 = vshrl.u32 %v71, 7
  %v73 = vsub.s32 1, %v72
  %v74 = vrot.slane %v24, %v73
  %v75 = vmul.f32 %v65, %v70
  %v76 = vmul.f32 %v65, %v74
  %v77 = vmul.f32 %v62, %v75
  %v78 = vmul.f32 %v61, %v76
  %v79 = vadd.f32 %v54, %v77
  %v80 = vadd.f32 %v55, %v78
  %81 = vrot.lane.b32.xlu0 %v21, 15
  %v82 = vpop.permute.xlu0 %81
  %83 = vrot.lane.b32.xlu0 %v22, 15
  %v84 = vpop.permute.xlu0 %83
  %vm85 = vcmp.lt.s32.totalorder %v33, 15
  %v86 = vsel %vm85, %v82, %v84
  %v87 = vsel %vm85, %v84, %v82
  %88 = vset.pattern.permute.xlu0 2
  %89 = vperm.xlu0 %88, %v27
  %v90 = vpop.permute.xlu0 %89
  %v92 = vlaneseq
  %v93 = vshrl.u32 %v92, 7
  %v94 = vsub.s32 2, %v93
  %v95 = vrot.slane %v23, %v94
  %v96 = vlaneseq
  %v97 = vshrl.u32 %v96, 7
  %v98 = vsub.s32 2, %v97
  %v99 = vrot.slane %v24, %v98
  %v100 = vmul.f32 %v90, %v95
  %v101 = vmul.f32 %v90, %v99
  %v102 = vmul.f32 %v87, %v100
  %v103 = vmul.f32 %v86, %v101
  %v104 = vadd.f32 %v79, %v102
  %v105 = vadd.f32 %v80, %v103
  %106 = vrot.lane.b32.xlu0 %v21, 1
  %v107 = vpop.permute.xlu0 %106
  %108 = vrot.lane.b32.xlu0 %v22, 1
  %v109 = vpop.permute.xlu0 %108
  %vm110 = vcmp.lt.s32.totalorder %v33, 1
  %v111 = vsel %vm110, %v107, %v109
  %v112 = vsel %vm110, %v109, %v107
  %113 = vset.pattern.permute.xlu0 3
  %114 = vperm.xlu0 %113, %v27
  %v115 = vpop.permute.xlu0 %114
  %v117 = vlaneseq
  %v118 = vshrl.u32 %v117, 7
  %v119 = vsub.s32 3, %v118
  %v120 = vrot.slane %v23, %v119
  %v121 = vlaneseq
  %v122 = vshrl.u32 %v121, 7
  %v123 = vsub.s32 3, %v122
  %v124 = vrot.slane %v24, %v123
  %v125 = vmul.f32 %v115, %v120
  %v126 = vmul.f32 %v115, %v124
  %v127 = vmul.f32 %v112, %v125
  %v128 = vmul.f32 %v111, %v126
  %v129 = vadd.f32 %v104, %v127
  %v130 = vadd.f32 %v105, %v128
  %131 = vset.pattern.permute.xlu0 4
  %132 = vperm.xlu0 %131, %v27
  %v133 = vpop.permute.xlu0 %132
  %v135 = vlaneseq
  %v136 = vshrl.u32 %v135, 7
  %v137 = vsub.s32 4, %v136
  %v138 = vrot.slane %v23, %v137
  %v139 = vlaneseq
  %v140 = vshrl.u32 %v139, 7
  %v141 = vsub.s32 4, %v140
  %v142 = vrot.slane %v24, %v141
  %v143 = vmul.f32 %v133, %v138
  %v144 = vmul.f32 %v133, %v142
  %v145 = vmul.f32 %v21, %v143
  %v146 = vmul.f32 %v22, %v144
  %v147 = vadd.f32 %v129, %v145
  %v148 = vadd.f32 %v130, %v146
  %149 = vrot.lane.b32.xlu0 %v21, 127
  %v150 = vpop.permute.xlu0 %149
  %151 = vrot.lane.b32.xlu0 %v22, 127
  %v152 = vpop.permute.xlu0 %151
  %vm153 = vcmp.lt.s32.totalorder %v33, 127
  %v154 = vsel %vm153, %v150, %v152
  %v155 = vsel %vm153, %v152, %v150
  %156 = vset.pattern.permute.xlu0 5
  %157 = vperm.xlu0 %156, %v27
  %v158 = vpop.permute.xlu0 %157
  %v160 = vlaneseq
  %v161 = vshrl.u32 %v160, 7
  %v162 = vsub.s32 5, %v161
  %v163 = vrot.slane %v23, %v162
  %v164 = vlaneseq
  %v165 = vshrl.u32 %v164, 7
  %v166 = vsub.s32 5, %v165
  %v167 = vrot.slane %v24, %v166
  %v168 = vmul.f32 %v158, %v163
  %v169 = vmul.f32 %v158, %v167
  %v170 = vmul.f32 %v154, %v168
  %v171 = vmul.f32 %v155, %v169
  %v172 = vadd.f32 %v147, %v170
  %v173 = vadd.f32 %v148, %v171
  %174 = vrot.lane.b32.xlu0 %v21, 113
  %v175 = vpop.permute.xlu0 %174
  %176 = vrot.lane.b32.xlu0 %v22, 113
  %v177 = vpop.permute.xlu0 %176
  %vm178 = vcmp.lt.s32.totalorder %v33, 113
  %v179 = vsel %vm178, %v175, %v177
  %v180 = vsel %vm178, %v177, %v175
  %181 = vset.pattern.permute.xlu0 6
  %182 = vperm.xlu0 %181, %v27
  %v183 = vpop.permute.xlu0 %182
  %v185 = vlaneseq
  %v186 = vshrl.u32 %v185, 7
  %v187 = vsub.s32 6, %v186
  %v188 = vrot.slane %v23, %v187
  %v189 = vlaneseq
  %v190 = vshrl.u32 %v189, 7
  %v191 = vsub.s32 6, %v190
  %v192 = vrot.slane %v24, %v191
  %v193 = vmul.f32 %v183, %v188
  %v194 = vmul.f32 %v183, %v192
  %v195 = vmul.f32 %v179, %v193
  %v196 = vmul.f32 %v180, %v194
  %v197 = vadd.f32 %v172, %v195
  %v198 = vadd.f32 %v173, %v196
  %199 = vrot.lane.b32.xlu0 %v21, 112
  %v200 = vpop.permute.xlu0 %199
  %201 = vrot.lane.b32.xlu0 %v22, 112
  %v202 = vpop.permute.xlu0 %201
  %vm203 = vcmp.lt.s32.totalorder %v33, 112
  %v204 = vsel %vm203, %v200, %v202
  %v205 = vsel %vm203, %v202, %v200
  %206 = vset.pattern.permute.xlu0 7
  %207 = vperm.xlu0 %206, %v27
  %v208 = vpop.permute.xlu0 %207
  %v210 = vlaneseq
  %v211 = vshrl.u32 %v210, 7
  %v212 = vsub.s32 7, %v211
  %v213 = vrot.slane %v23, %v212
  %v214 = vlaneseq
  %v215 = vshrl.u32 %v214, 7
  %v216 = vsub.s32 7, %v215
  %v217 = vrot.slane %v24, %v216
  %v218 = vmul.f32 %v208, %v213
  %v219 = vmul.f32 %v208, %v217
  %v220 = vmul.f32 %v204, %v218
  %v221 = vmul.f32 %v205, %v219
  %v222 = vadd.f32 %v197, %v220
  %v223 = vadd.f32 %v198, %v221
  %224 = vrot.lane.b32.xlu0 %v21, 111
  %v225 = vpop.permute.xlu0 %224
  %226 = vrot.lane.b32.xlu0 %v22, 111
  %v227 = vpop.permute.xlu0 %226
  %vm228 = vcmp.lt.s32.totalorder %v33, 111
  %v229 = vsel %vm228, %v225, %v227
  %v230 = vsel %vm228, %v227, %v225
  %231 = vset.pattern.permute.xlu0 8
  %232 = vperm.xlu0 %231, %v27
  %v233 = vpop.permute.xlu0 %232
  %v235 = vlaneseq
  %v236 = vshrl.u32 %v235, 7
  %v237 = vsub.s32 0, %v236
  %v238 = vrot.slane %v25, %v237
  %v239 = vlaneseq
  %v240 = vshrl.u32 %v239, 7
  %v241 = vsub.s32 0, %v240
  %v242 = vrot.slane %v26, %v241
  %v243 = vmul.f32 %v233, %v238
  %v244 = vmul.f32 %v233, %v242
  %v245 = vmul.f32 %v229, %v243
  %v246 = vmul.f32 %v230, %v244
  %v247 = vadd.f32 %v222, %v245
  %v248 = vadd.f32 %v223, %v246
  %v249 = vadd.f32 %v247, %v248
  %250 = vadd.xlane.f32.xlu0 %v249
  %v251 = vpop.xlane.xlu0 %250
  %v252 = vmul.f32 %v247, %v247
  %v253 = vmul.f32 %v248, %v248
  %v254 = vadd.f32 %v252, %v253
  %255 = vadd.xlane.f32.xlu0 %v254
  %v256 = vpop.xlane.xlu0 %255
  %v258 = vrot.slane %v251, 4
  %v260 = vadd.f32 %v251, %v258
  %v262 = vrot.slane %v256, 4
  %v264 = vadd.f32 %v256, %v262
  %v265 = vmul.f32 %v260, 0.001953125
  %v266 = vmul.f32 %v264, 0.001953125
  %v267 = vmul.f32 %v265, %v265
  %v268 = vsub.f32 %v266, %v267
  %v269 = vmax.f32 %v268, 0.0
  %v270 = vadd.f32 %v269, 1e-05
  %v271 = vrsqrt.pop %v270
  %v272 = vld [vmem:[%s4] sm:$0xf]
  %v273 = vmul.f32 %v272, %v271
  %v274 = vmul.f32 %v265, %v273
  %276 = vrot.lane.b32.xlu0 %v274, 1
  %v277 = vpop.permute.xlu0 %276
  %v279 = vsub.f32 %v272, %v277
  %v281 = vrot.slane %v273, 4
  %vm283 = vcmask 1043456
  %v284 = vsel %vm283, %v273, %v281
  %v286 = vrot.slane %v279, 4
  %v288 = vsel %vm283, %v279, %v286
  %290 = vset.pattern.permute.xlu0 0
  %291 = vperm.xlu0 %290, %v284
  %v292 = vpop.permute.xlu0 %291
  %v294 = vmul.f32 %v247, %v292
  %v295 = vmul.f32 %v248, %v292
  %297 = vset.pattern.permute.xlu0 1
  %298 = vperm.xlu0 %297, %v288
  %v299 = vpop.permute.xlu0 %298
  %v301 = vadd.f32 %v294, %v299
  %v302 = vadd.f32 %v295, %v299
  %v303 = vld [vmem:[%s3] sm:$0xff]
  %v304 = vpack.c.bf16 %v303, %v303
  %v305 = vpack.c.bf16 %v301, %v301
  %v306 = vpack.c.bf16 %v302, %v302
  %vm307 = vcmask 31744
  %v309 = vsel %vm307, %v304, 0
  %vm311 = vcmask 1041408
  %v313 = vsel %vm311, %v305, 0
  %v316 = vsel %vm311, %v306, 0
  %318 = vmatprep.subr.bf16.mxu0 0
  %319 = vmatpush1.bf16.msra.mxu0 0
  %320 = vmatprep.subr.bf16.mxu0 0
  %321 = vmatpush1.bf16.msra.mxu0 0
  %322 = vmatprep.subr.bf16.mxu0 0
  %323 = vmatpush1.bf16.msra.mxu0 0
  %324 = vmatprep.subr.bf16.mxu0 0
  %325 = vmatpush1.bf16.msra.mxu0 0
  %326 = vmatprep.subr.bf16.mxu0 0
  %327 = vmatpush1.bf16.msra.mxu0 0
  %328 = vmatprep.subr.bf16.mxu0 0
  %329 = vmatpush1.bf16.msra.mxu0 0
  %330 = vmatprep.subr.bf16.mxu0 0
  %331 = vmatpush1.bf16.msra.mxu0 0
  %332 = vmatprep.subr.bf16.mxu0 %v316
  %333 = vmatpush1.bf16.msra.mxu0 %v313
  %334 = vmatprep.subr.bf16.mxu0 0
  %335 = vmatpush2.bf16.msra.mxu0 0
  %336 = vmatprep.subr.bf16.mxu0 0
  %337 = vmatpush2.bf16.msra.mxu0 0
  %338 = vmatprep.subr.bf16.mxu0 0
  %339 = vmatpush2.bf16.msra.mxu0 0
  %340 = vmatprep.subr.bf16.mxu0 0
  %341 = vmatpush2.bf16.msra.mxu0 0
  %342 = vmatprep.subr.bf16.mxu0 0
  %343 = vmatpush2.bf16.msra.mxu0 0
  %344 = vmatprep.subr.bf16.mxu0 0
  %345 = vmatpush2.bf16.msra.mxu0 0
  %346 = vmatprep.subr.bf16.mxu0 0
  %347 = vmatpush2.bf16.msra.mxu0 0
  %348 = vmatprep.subr.bf16.mxu0 0
  %349 = vmatpush2.bf16.msra.mxu0 0
  %350 = vmatprep.mubr.bf16.mxu0 0
  %351 = vmatmul.mubr.bf16.gmra.mxu0 %v309
  %v352 = vpop.f32.mrf.mxu0
  %v353 = vadd.f32 0.0, %v352
  %v354 = vpop.f32.mrf.mxu0
  %v355 = vadd.f32 0.0, %v354
  %v356 = vpop.f32.mrf.mxu0
  %v357 = vpop.f32.mrf.mxu0
  %358 = vdwg.mxu0
  %359 = vst [vmem:[%s5] sm:$0xff] %v353
  %360 = vst [vmem:[%s5 + $0x8] sm:$0xff] %v355
  %v363 = vrot.slane %v305, 2
  %v364 = vrot.slane %v306, 2
  %v366 = vsel %vm311, %v363, 0
  %v369 = vsel %vm311, %v364, 0
  %371 = vmatprep.subr.bf16.mxu0 0
  %372 = vmatpush1.bf16.msra.mxu0 0
  %373 = vmatprep.subr.bf16.mxu0 0
  %374 = vmatpush1.bf16.msra.mxu0 0
  %375 = vmatprep.subr.bf16.mxu0 0
  %376 = vmatpush1.bf16.msra.mxu0 0
  %377 = vmatprep.subr.bf16.mxu0 0
  %378 = vmatpush1.bf16.msra.mxu0 0
  %379 = vmatprep.subr.bf16.mxu0 0
  %380 = vmatpush1.bf16.msra.mxu0 0
  %381 = vmatprep.subr.bf16.mxu0 0
  %382 = vmatpush1.bf16.msra.mxu0 0
  %383 = vmatprep.subr.bf16.mxu0 0
  %384 = vmatpush1.bf16.msra.mxu0 0
  %385 = vmatprep.subr.bf16.mxu0 %v369
  %386 = vmatpush1.bf16.msra.mxu0 %v366
  %387 = vmatprep.subr.bf16.mxu0 0
  %388 = vmatpush2.bf16.msra.mxu0 0
  %389 = vmatprep.subr.bf16.mxu0 0
  %390 = vmatpush2.bf16.msra.mxu0 0
  %391 = vmatprep.subr.bf16.mxu0 0
  %392 = vmatpush2.bf16.msra.mxu0 0
  %393 = vmatprep.subr.bf16.mxu0 0
  %394 = vmatpush2.bf16.msra.mxu0 0
  %395 = vmatprep.subr.bf16.mxu0 0
  %396 = vmatpush2.bf16.msra.mxu0 0
  %397 = vmatprep.subr.bf16.mxu0 0
  %398 = vmatpush2.bf16.msra.mxu0 0
  %399 = vmatprep.subr.bf16.mxu0 0
  %400 = vmatpush2.bf16.msra.mxu0 0
  %401 = vmatprep.subr.bf16.mxu0 0
  %402 = vmatpush2.bf16.msra.mxu0 0
  %403 = vmatprep.mubr.bf16.mxu0 0
  %404 = vmatmul.mubr.bf16.gmra.mxu0 %v309
  %v405 = vpop.f32.mrf.mxu0
  %v406 = vadd.f32 0.0, %v405
  %v407 = vpop.f32.mrf.mxu0
  %v408 = vadd.f32 0.0, %v407
  %v409 = vpop.f32.mrf.mxu0
  %v410 = vpop.f32.mrf.mxu0
  %411 = vdwg.mxu0
  %412 = vst [vmem:[%s5 + $0x10] sm:$0xff] %v406
  %413 = vst [vmem:[%s5 + $0x18] sm:$0xff] %v408
  // Predicated region
  $region22: #{separable_conv2d.1} parent=0 // pred_check
    _
  $region23: #{separable_conv2d.1} parent=0 // pred_check_branch
    %415 = sbr.rel (0) target = $region25
  $region24: #{separable_conv2d.1} parent=0 // pred_region
    _
  $region25: #{separable_conv2d.1} parent=0 // pred_fallthru
    _
  // Predicated region
  $region26: #{separable_conv2d.1} parent=0 // pred_check
    _
  $region27: #{separable_conv2d.1} parent=0 // pred_check_branch
    %417 = sbr.rel (0) target = $region29
  $region28: #{separable_conv2d.1} parent=0 // pred_region
    _
  $region29: #{separable_conv2d.1} parent=0 // pred_fallthru
    _

</llo_original>
